<compile_context>
chip_gen: v7x
topology: tpu7x:2x2x1
jax: 0.10.0
libtpu: 0.0.40
codegen_flags: <defaults>
</compile_context>

<pallas_src>
import functools

import jax
import jax.numpy as jnp
from jax.experimental import pallas as pl
from jax.experimental.pallas import tpu as pltpu


def _parser_probe_kernel(x_ref, proj_ref, w_ref, out_ref, *, cc, out_w):
    """x_ref: (N,H); proj_ref: (H,R); w_ref: (R, Cc+Cu); out_ref: (N, out_w)."""
    n = x_ref.shape[0]
    cw = w_ref.shape[1]            # Cc + Cu

    # Projection: t = x @ proj                               (N, R)   [MXU]
    t = jnp.dot(x_ref[...], proj_ref[...], preferred_element_type=jnp.float32)

    # Fused classifiers: full = t @ [vc | vu]                (N, Cc+Cu) [MXU]
    full = jnp.dot(t, w_ref[...], preferred_element_type=jnp.float32)

    # "Next row" copies via XLU rotate: row i <- row (i+1) mod N.
    t_next = pltpu.roll(t, shift=n - 1, axis=0)
    full_next = pltpu.roll(full, shift=n - 1, axis=0)

    # Squared distance between consecutive projected tokens.
    diffs = t_next - t
    d = jnp.sum(diffs * diffs, axis=1, keepdims=True)        # (N, 1)

    # Columns [:Cc]  -> scores_c = diffs @ vc == delta of full's vc-columns.
    # Columns [Cc:]  -> scores_u = t @ vu     == full's vu-columns unchanged.
    col = jax.lax.broadcasted_iota(jnp.int32, full.shape, 1)
    scores = jnp.where(col < cc, full_next - full, full)      # (N, Cc+Cu)

    # Pack into one lane-dense slab: [d | scores_c | scores_u | 0-pad].
    out_ref[...] = jnp.zeros((n, out_w), jnp.float32)
    out_ref[:, 0:1] = d
    out_ref[:, 1:1 + cw] = scores


def parser_probe(x, proj, vectors_c, vectors_u):
    B, S, H = x.shape
    R = proj.shape[1]
    Cc = vectors_c.shape[1]
    Cu = vectors_u.shape[1]
    N = B * S
    CW = Cc + Cu
    OUT_W = ((1 + CW + 127) // 128) * 128   # lane-dense packed output width

    # Shape plumbing in XLA (free): flatten rows, concat classifier weights.
    x2d = x.reshape(N, H).astype(jnp.float32)
    w = jnp.concatenate([vectors_c, vectors_u], axis=1)       # (R, Cc+Cu)

    vmem = pl.BlockSpec(memory_space=pltpu.MemorySpace.VMEM)
    cost = pl.CostEstimate(
        flops=2 * N * H * R + 2 * N * R * CW + 4 * N * R,
        transcendentals=0,
        bytes_accessed=4 * (N * H + H * R + R * CW + N * OUT_W),
    )
    # Toy shapes fit wholly in VMEM on every TPU generation; a row grid with
    # dimension_semantics=("parallel",) only becomes worthwhile at much larger
    # B*S (v7x: 64 MiB VMEM, 2 TensorCores).
    slab = pl.pallas_call(
        functools.partial(_parser_probe_kernel, cc=Cc, out_w=OUT_W),
        out_shape=jax.ShapeDtypeStruct((N, OUT_W), jnp.float32),
        in_specs=[vmem, vmem, vmem],
        out_specs=vmem,
        cost_estimate=cost,
    )(x2d, proj, w)

    # Unpack in the wrapper; rows with s == S-1 (cross-sequence wraparound
    # diffs) are dropped from d_pred / scores_c here.
    slab3 = slab.reshape(B, S, OUT_W)
    d_pred = slab3[:, :-1, 0]
    scores_c = slab3[:, :-1, 1:1 + Cc]
    scores_u = slab3[:, :, 1 + Cc:1 + Cc + Cu]
    return d_pred, scores_c, scores_u


def parser_probe_ref(x, proj, vectors_c, vectors_u):
    t = jnp.einsum('bsh,hr->bsr', x, proj)
    diffs = t[:, 1:, :] - t[:, :-1, :]
    return (jnp.sum(diffs ** 2, axis=2),
            jnp.einsum('bsr,rc->bsc', diffs, vectors_c),
            jnp.einsum('bsr,ru->bsu', t, vectors_u))


if __name__ == "__main__":
    # Small shapes consistent with the module's forward.
    B, S, H = 2, 8, 32          # batch, max_seq_len, hidden_dim
    R, Cc, Cu = 16, 5, 7        # probe_rank, number_labels_c, number_labels_u

    key = jax.random.PRNGKey(0)
    kx, kp, kc, ku = jax.random.split(key, 4)

    x = jax.random.normal(kx, (B, S, H), dtype=jnp.float32)
    # Deterministic parameter init matching nn.init.uniform_(-0.05, 0.05).
    proj = jax.random.uniform(kp, (H, R), minval=-0.05, maxval=0.05,
                              dtype=jnp.float32)
    vectors_c = jax.random.uniform(kc, (R, Cc), minval=-0.05, maxval=0.05,
                                   dtype=jnp.float32)
    vectors_u = jax.random.uniform(ku, (R, Cu), minval=-0.05, maxval=0.05,
                                   dtype=jnp.float32)

    d_pred, scores_c, scores_u = parser_probe(x, proj, vectors_c, vectors_u)
    jax.block_until_ready((d_pred, scores_c, scores_u))

    d_ref, sc_ref, su_ref = parser_probe_ref(x, proj, vectors_c, vectors_u)
    assert d_pred.shape == (B, S - 1)
    assert scores_c.shape == (B, S - 1, Cc)
    assert scores_u.shape == (B, S, Cu)
    assert jnp.allclose(d_pred, d_ref, atol=1e-5)
    assert jnp.allclose(scores_c, sc_ref, atol=1e-5)
    assert jnp.allclose(scores_u, su_ref, atol=1e-5)

    print("KERNEL_OK")
</pallas_src>

<mosaic_0001>
module attributes {stable_mosaic.version = 11 : i64} {
  func.func @_parser_probe_kernel(%arg0: memref<16x32xf32, #tpu.memory_space<vmem>>, %arg1: memref<32x16xf32, #tpu.memory_space<vmem>>, %arg2: memref<16x12xf32, #tpu.memory_space<vmem>>, %arg3: memref<16x128xf32, #tpu.memory_space<vmem>>) attributes {dimension_semantics = [], scalar_prefetch = 0 : i64, scratch_operands = 0 : i64, tpu.core_type = #tpu.core_type<tc>} {
    %c0 = arith.constant 0 : index
    %c0_0 = arith.constant 0 : index
    %0 = vector.load %arg0[%c0, %c0_0] : memref<16x32xf32, #tpu.memory_space<vmem>>, vector<16x32xf32>
    %c0_1 = arith.constant 0 : index
    %c0_2 = arith.constant 0 : index
    %1 = vector.load %arg1[%c0_1, %c0_2] : memref<32x16xf32, #tpu.memory_space<vmem>>, vector<32x16xf32>
    %cst = arith.constant dense<0.000000e+00> : vector<16x16xf32>
    %2 = tpu.matmul %0, %1, %cst {dimension_numbers = #tpu.dot_dimension_numbers<[1], [0], [0], [1], [0, 0, 1, 1], [], []>} : vector<16x32xf32>, vector<32x16xf32>, vector<16x16xf32> -> vector<16x16xf32>
    %c0_3 = arith.constant 0 : index
    %c0_4 = arith.constant 0 : index
    %3 = vector.load %arg2[%c0_3, %c0_4] : memref<16x12xf32, #tpu.memory_space<vmem>>, vector<16x12xf32>
    %cst_5 = arith.constant dense<0.000000e+00> : vector<16x12xf32>
    %4 = tpu.matmul %2, %3, %cst_5 {dimension_numbers = #tpu.dot_dimension_numbers<[1], [0], [0], [1], [0, 0, 1, 1], [], []>} : vector<16x16xf32>, vector<16x12xf32>, vector<16x12xf32> -> vector<16x12xf32>
    %c15_i32 = arith.constant 15 : i32
    %5 = tpu.dynamic_rotate %2 by %c15_i32 dim 0 : vector<16x16xf32>, i32 -> vector<16x16xf32>
    %c15_i32_6 = arith.constant 15 : i32
    %6 = tpu.dynamic_rotate %4 by %c15_i32_6 dim 0 : vector<16x12xf32>, i32 -> vector<16x12xf32>
    %7 = arith.subf %5, %2 : vector<16x16xf32>
    %8 = arith.mulf %7, %7 : vector<16x16xf32>
    %cst_7 = arith.constant dense<0.000000e+00> : vector<16xf32>
    %9 = vector.multi_reduction <add>, %8, %cst_7 [1] : vector<16x16xf32> to vector<16xf32>
    %10 = vector.shape_cast %9 : vector<16xf32> to vector<16x1xf32>
    %11 = tpu.iota {dimensions = array<i32: 1>} : vector<16x12xi32>
    %c5_i32 = arith.constant 5 : i32
    %12 = vector.broadcast %c5_i32 : i32 to vector<16x12xi32>
    %13 = arith.cmpi slt, %11, %12 : vector<16x12xi32>
    %14 = arith.subf %6, %4 : vector<16x12xf32>
    %15 = arith.select %13, %14, %4 : vector<16x12xi1>, vector<16x12xf32>
    %cst_8 = arith.constant 0.000000e+00 : f32
    %16 = vector.broadcast %cst_8 : f32 to vector<16x128xf32>
    %c0_9 = arith.constant 0 : index
    %c0_10 = arith.constant 0 : index
    %17 = vector.load %arg3[%c0_9, %c0_10] : memref<16x128xf32, #tpu.memory_space<vmem>>, vector<16x128xf32>
    tpu.vector_store %arg3[%c0_9, %c0_10], %16 {strides = array<i32>} : memref<16x128xf32, #tpu.memory_space<vmem>>, vector<16x128xf32>,
    %c0_11 = arith.constant 0 : index
    %c0_12 = arith.constant 0 : index
    %18 = vector.load %arg3[%c0_11, %c0_12] : memref<16x128xf32, #tpu.memory_space<vmem>>, vector<16x1xf32>
    tpu.vector_store %arg3[%c0_11, %c0_12], %10 {strides = array<i32>} : memref<16x128xf32, #tpu.memory_space<vmem>>, vector<16x1xf32>,
    %c0_13 = arith.constant 0 : index
    %c1 = arith.constant 1 : index
    %19 = vector.load %arg3[%c0_13, %c1] : memref<16x128xf32, #tpu.memory_space<vmem>>, vector<16x12xf32>
    tpu.vector_store %arg3[%c0_13, %c1], %15 {strides = array<i32>} : memref<16x128xf32, #tpu.memory_space<vmem>>, vector<16x12xf32>,
    return
  }
}

</mosaic_0001>

<llo_original>
// kernel: tpu_custom_call.1
$region0: #{tpu_custom_call.1}
  #allocation0 [shape = 'u32[]', space=smem, size = 0x4, offset = 0x4, fixed_abs, tag = 'smem constant byte address 0x4 - core index']
  #allocation1 [shape = 'u32[144,128]{1,0:T(1,128)}', space=vmem, size = 0x12000, scoped, tag = 'internal scratch']
  %s0 = inlined_call_operand.vmem [shape: f32[16,32], index: 0, kind: input, shape index: {}]
  %s1 = inlined_call_operand.vmem [shape: f32[32,16], index: 1, kind: input, shape index: {}]
  %s2 = inlined_call_operand.vmem [shape: f32[16,12], index: 2, kind: input, shape index: {}]
  %s3 = inlined_call_operand.hbm [shape: f32[16,128], index: 3, kind: output, shape index: {}]
  %s4 = sld [smem:[#allocation0]]
  $region22: #{tpu_custom_call.1} parent=0
    _
  %s6 = ssub.s32 1, %s4
  %s7 = scalar_select 0, %s6, %s4
  $region1: #{tpu_custom_call.1} parent=0
    #allocation2 [shape = 'u8[8192]{0}', space=vmem, size = 0x2000, scoped, tag = 'output window, operand 0, single buffered']
    #allocation3 [shape = 's32[1]{0}', space=sflag, size = 0x4, scoped, tag = 'scoped memory for tpu_custom_call.1']
    %8 = vsyncpa [#allocation3], 0
    // Predicated region
    $region2: #{tpu_custom_call.1} parent=1 // pred_check
      _
    $region3: #{tpu_custom_call.1} parent=1 // pred_check_branch
      %10 = sbr.rel (0) target = $region5
    $region4: #{tpu_custom_call.1} parent=1 // pred_region
      _
    $region5: #{tpu_custom_call.1} parent=1 // pred_fallthru
      _
    // Predicated region
    $region6: #{tpu_custom_call.1} parent=1 // pred_check
      _
    $region7: #{tpu_custom_call.1} parent=1 // pred_check_branch
      %12 = sbr.rel (0) target = $region9
    $region8: #{tpu_custom_call.1} parent=1 // pred_region
      _
    $region9: #{tpu_custom_call.1} parent=1 // pred_fallthru
      _
    // Predicated region
    $region10: #{tpu_custom_call.1} parent=1 // pred_check
      _
    $region11: #{tpu_custom_call.1} parent=1 // pred_check_branch
      %14 = sbr.rel (0) target = $region13
    $region12: #{tpu_custom_call.1} parent=1 // pred_region
      _
    $region13: #{tpu_custom_call.1} parent=1 // pred_fallthru
      _
    %v15 = vld [vmem:[%s0] sm:$0xff]
    %v16 = vld [vmem:[%s0 + $0x8] sm:$0xff]
    %v17 = vld [vmem:[%s1] sm:$0xff]
    %v18 = vld [vmem:[%s1 + $0x8] sm:$0xff]
    %v19 = vld [vmem:[%s1 + $0x10] sm:$0xff]
    %v20 = vld [vmem:[%s1 + $0x18] sm:$0xff]
    %vm21 = vcmask 261120
    %v23 = vsel %vm21, %v15, 0
    %v26 = vsel %vm21, %v16, 0
    %28 = vmatprep.subr.mxu0 0.0
    %29 = vmatpush1.msra.mxu0 %v17
    %30 = vmatprep.subr.mxu0 0.0
    %31 = vmatpush1.msra.mxu0 %v18
    %32 = vmatprep.subr.mxu0 0.0
    %33 = vmatpush1.msra.mxu0 %v19
    %34 = vmatprep.subr.mxu0 0.0
    %35 = vmatpush1.msra.mxu0 %v20
    %36 = vmatprep.subr.mxu0 0.0
    %37 = vmatpush1.msra.mxu0 0.0
    %38 = vmatprep.subr.mxu0 0.0
    %39 = vmatpush1.msra.mxu0 0.0
    %40 = vmatprep.subr.mxu0 0.0
    %41 = vmatpush1.msra.mxu0 0.0
    %42 = vmatprep.subr.mxu0 0.0
    %43 = vmatpush1.msra.mxu0 0.0
    %44 = vmatprep.subr.mxu0 0.0
    %45 = vmatpush1.msra.mxu0 0.0
    %46 = vmatprep.subr.mxu0 0.0
    %47 = vmatpush1.msra.mxu0 0.0
    %48 = vmatprep.subr.mxu0 0.0
    %49 = vmatpush1.msra.mxu0 0.0
    %50 = vmatprep.subr.mxu0 0.0
    %51 = vmatpush1.msra.mxu0 0.0
    %52 = vmatprep.subr.mxu0 0.0
    %53 = vmatpush1.msra.mxu0 0.0
    %54 = vmatprep.subr.mxu0 0.0
    %55 = vmatpush1.msra.mxu0 0.0
    %56 = vmatprep.subr.mxu0 0.0
    %57 = vmatpush1.msra.mxu0 0.0
    %58 = vmatprep.subr.mxu0 0.0
    %59 = vmatpush1.msra.mxu0 0.0
    %60 = vmatprep.subr.mxu0 0.0
    %61 = vmatpush1.msra.mxu0 0.0
    %62 = vmatprep.subr.mxu0 0.0
    %63 = vmatpush1.msra.mxu0 0.0
    %64 = vmatprep.subr.mxu0 0.0
    %65 = vmatpush1.msra.mxu0 0.0
    %66 = vmatprep.subr.mxu0 0.0
    %67 = vmatpush1.msra.mxu0 0.0
    %68 = vmatprep.subr.mxu0 0.0
    %69 = vmatpush1.msra.mxu0 0.0
    %70 = vmatprep.subr.mxu0 0.0
    %71 = vmatpush1.msra.mxu0 0.0
    %72 = vmatprep.subr.mxu0 0.0
    %73 = vmatpush1.msra.mxu0 0.0
    %74 = vmatprep.subr.mxu0 0.0
    %75 = vmatpush1.msra.mxu0 0.0
    %76 = vmatprep.subr.mxu0 0.0
    %77 = vmatpush1.msra.mxu0 0.0
    %78 = vmatprep.subr.mxu0 0.0
    %79 = vmatpush1.msra.mxu0 0.0
    %80 = vmatprep.subr.mxu0 0.0
    %81 = vmatpush1.msra.mxu0 0.0
    %82 = vmatprep.subr.mxu0 0.0
    %83 = vmatpush1.msra.mxu0 0.0
    %84 = vmatprep.subr.mxu0 0.0
    %85 = vmatpush1.msra.mxu0 0.0
    %86 = vmatprep.subr.mxu0 0.0
    %87 = vmatpush1.msra.mxu0 0.0
    %88 = vmatprep.subr.mxu0 0.0
    %89 = vmatpush1.msra.mxu0 0.0
    %90 = vmatprep.subr.mxu0 0.0
    %91 = vmatpush1.msra.mxu0 0.0
    %92 = vmatprep.mubr.f32.mxu0 0.0
    %93 = vmatmul.mubr.f32.gmra.mrb[0].mxu0 %v23
    %v94 = vpop.f32.mrb[0].mxu0
    %v95 = vadd.f32 0.0, %v94
    %v96 = vpop.f32.mrb[0].mxu0
    %97 = vmatprep.mubr.f32.mxu0 0.0
    %98 = vmatmul.mubr.f32.gmra.mrb[0].mxu0 %v26
    %v99 = vpop.f32.mrb[0].mxu0
    %v100 = vadd.f32 0.0, %v99
    %v101 = vpop.f32.mrb[0].mxu0
    %102 = vdwg.mxu0
    %v103 = vld [vmem:[%s2] sm:$0xff]
    %v104 = vld [vmem:[%s2 + $0x8] sm:$0xff]
    %vm105 = vcmask 130048
    %v107 = vsel %vm105, %v95, 0
    %v110 = vsel %vm105, %v100, 0
    %112 = vmatprep.subr.mxu0 0.0
    %113 = vmatpush1.msra.mxu0 %v103
    %114 = vmatprep.subr.mxu0 0.0
    %115 = vmatpush1.msra.mxu0 %v104
    %116 = vmatprep.subr.mxu0 0.0
    %117 = vmatpush1.msra.mxu0 0.0
    %118 = vmatprep.subr.mxu0 0.0
    %119 = vmatpush1.msra.mxu0 0.0
    %120 = vmatprep.subr.mxu0 0.0
    %121 = vmatpush1.msra.mxu0 0.0
    %122 = vmatprep.subr.mxu0 0.0
    %123 = vmatpush1.msra.mxu0 0.0
    %124 = vmatprep.subr.mxu0 0.0
    %125 = vmatpush1.msra.mxu0 0.0
    %126 = vmatprep.subr.mxu0 0.0
    %127 = vmatpush1.msra.mxu0 0.0
    %128 = vmatprep.subr.mxu0 0.0
    %129 = vmatpush1.msra.mxu0 0.0
    %130 = vmatprep.subr.mxu0 0.0
    %131 = vmatpush1.msra.mxu0 0.0
    %132 = vmatprep.subr.mxu0 0.0
    %133 = vmatpush1.msra.mxu0 0.0
    %134 = vmatprep.subr.mxu0 0.0
    %135 = vmatpush1.msra.mxu0 0.0
    %136 = vmatprep.subr.mxu0 0.0
    %137 = vmatpush1.msra.mxu0 0.0
    %138 = vmatprep.subr.mxu0 0.0
    %139 = vmatpush1.msra.mxu0 0.0
    %140 = vmatprep.subr.mxu0 0.0
    %141 = vmatpush1.msra.mxu0 0.0
    %142 = vmatprep.subr.mxu0 0.0
    %143 = vmatpush1.msra.mxu0 0.0
    %144 = vmatprep.subr.mxu0 0.0
    %145 = vmatpush1.msra.mxu0 0.0
    %146 = vmatprep.subr.mxu0 0.0
    %147 = vmatpush1.msra.mxu0 0.0
    %148 = vmatprep.subr.mxu0 0.0
    %149 = vmatpush1.msra.mxu0 0.0
    %150 = vmatprep.subr.mxu0 0.0
    %151 = vmatpush1.msra.mxu0 0.0
    %152 = vmatprep.subr.mxu0 0.0
    %153 = vmatpush1.msra.mxu0 0.0
    %154 = vmatprep.subr.mxu0 0.0
    %155 = vmatpush1.msra.mxu0 0.0
    %156 = vmatprep.subr.mxu0 0.0
    %157 = vmatpush1.msra.mxu0 0.0
    %158 = vmatprep.subr.mxu0 0.0
    %159 = vmatpush1.msra.mxu0 0.0
    %160 = vmatprep.subr.mxu0 0.0
    %161 = vmatpush1.msra.mxu0 0.0
    %162 = vmatprep.subr.mxu0 0.0
    %163 = vmatpush1.msra.mxu0 0.0
    %164 = vmatprep.subr.mxu0 0.0
    %165 = vmatpush1.msra.mxu0 0.0
    %166 = vmatprep.subr.mxu0 0.0
    %167 = vmatpush1.msra.mxu0 0.0
    %168 = vmatprep.subr.mxu0 0.0
    %169 = vmatpush1.msra.mxu0 0.0
    %170 = vmatprep.subr.mxu0 0.0
    %171 = vmatpush1.msra.mxu0 0.0
    %172 = vmatprep.subr.mxu0 0.0
    %173 = vmatpush1.msra.mxu0 0.0
    %174 = vmatprep.subr.mxu0 0.0
    %175 = vmatpush1.msra.mxu0 0.0
    %176 = vmatprep.mubr.f32.mxu0 0.0
    %177 = vmatmul.mubr.f32.gmra.mrb[0].mxu0 %v107
    %v178 = vpop.f32.mrb[0].mxu0
    %v179 = vadd.f32 0.0, %v178
    %v180 = vpop.f32.mrb[0].mxu0
    %181 = vmatprep.mubr.f32.mxu0 0.0
    %182 = vmatmul.mubr.f32.gmra.mrb[0].mxu0 %v110
    %v183 = vpop.f32.mrb[0].mxu0
    %v184 = vadd.f32 0.0, %v183
    %v185 = vpop.f32.mrb[0].mxu0
    %186 = vdwg.mxu0
    %v187 = vrot.slane %v95, 1
    %v188 = vrot.slane %v100, 1
    %v189 = vlaneseq
    %v190 = vshrl.u32 %v189, 7
    %vm191 = vcmp.lt.s32.totalorder %v190, 7
    %v192 = vsel %vm191, %v187, %v188
    %v193 = vsel %vm191, %v188, %v187
    %v194 = vrot.slane %v179, 1
    %v195 = vrot.slane %v184, 1
    %v196 = vsel %vm191, %v194, %v195
    %v197 = vsel %vm191, %v195, %v194
    %v198 = vsub.f32 %v192, %v95
    %v199 = vsub.f32 %v193, %v100
    %v200 = vmul.f32 %v198, %v198
    %v201 = vmul.f32 %v199, %v199
    %v202 = vsel %vm105, %v200, 0.0
    %203 = vadd.xlane.f32.xlu0 %v202
    %v204 = vpop.xlane.xlu0 %203
    %v205 = vsel %vm105, %v201, 0.0
    %206 = vadd.xlane.f32.xlu0 %v205
    %v207 = vpop.xlane.xlu0 %206
    %v208 = vlaneseq
    %v209 = vand.u32 %v208, 127
    %vm210 = vcmp.lt.s32.totalorder %v209, 5
    %v211 = vsub.f32 %v196, %v179
    %v212 = vsub.f32 %v197, %v184
    %v213 = vsel %vm210, %v211, %v179
    %v214 = vsel %vm210, %v212, %v184
    %215 = vst [vmem:[#allocation2] sm:$0xff] 0.0
    %216 = vst [vmem:[#allocation2 + $0x8] sm:$0xff] 0.0
    %vm217 = vcmask 7168
    %218 = vst.msk [vmem:[#allocation2] sm:$0xff] %vm217, %v204
    %219 = vst.msk [vmem:[#allocation2 + $0x8] sm:$0xff] %vm217, %v207
    %222 = vrot.lane.b32.xlu0 %v213, 1
    %v223 = vpop.permute.xlu0 %222
    %224 = vrot.lane.b32.xlu0 %v214, 1
    %v225 = vpop.permute.xlu0 %224
    %vm228 = vcmask 105480
    %229 = vst.msk [vmem:[#allocation2] sm:$0xff] %vm228, %v223
    %230 = vst.msk [vmem:[#allocation2 + $0x8] sm:$0xff] %vm228, %v225
    // Predicated region
    $region14: #{tpu_custom_call.1} parent=1 // pred_check
      _
    $region15: #{tpu_custom_call.1} parent=1 // pred_check_branch
      %232 = sbr.rel (0) target = $region17
    $region16: #{tpu_custom_call.1} parent=1 // pred_region
      %s234 = ssub.s32 256, 256
      %235 = vsyncadd [#allocation3], %s234
      %s236 = sshll.u32 [#allocation2], 4
      %s237 = int_to_ptr.vmem [resolvable:$true] %s236
      %242 = dma.vmem_to_hbm [thread:$0]  %s237, 256, %s3, [#allocation3], 128, 128, 8
    $region17: #{tpu_custom_call.1} parent=1 // pred_fallthru
      _
    // Predicated region
    $region18: #{tpu_custom_call.1} parent=1 // pred_check
      _
    $region19: #{tpu_custom_call.1} parent=1 // pred_check_branch
      %244 = sbr.rel (0) target = $region21
    $region20: #{tpu_custom_call.1} parent=1 // pred_region
      %245 = dma.done [#allocation3], 256
    $region21: #{tpu_custom_call.1} parent=1 // pred_fallthru
      _
    %246 = vsyncpa [#allocation3], 1

</llo_original>
